<compile_context>
chip_gen: v7x
topology: tpu7x:2x2x1
jax: 0.10.0
libtpu: 0.0.40
codegen_flags: <defaults>
</compile_context>

<pallas_src>
import functools

import jax
import jax.numpy as jnp
from jax.experimental import pallas as pl
from jax.experimental.pallas import tpu as pltpu


def _round_up(n, m):
    return ((n + m - 1) // m) * m


def _em_kernel(x_ref, w_ref, leftp_ref, logprior_ref, o_ref, *, type_, approx_recip):
    # x_ref:        [K, TB]   transposed inputs (K = expert_num * num_classes)
    # w_ref:        [K, C]    stacked (transposed) expert weights, VMEM-resident
    # leftp_ref:    [C, TB]   transposed left_p
    # logprior_ref: [C, 1]    precomputed log(priority)
    # o_ref:        [C, TB]   transposed softmax output (lane-dense)
    C = o_ref.shape[0]

    x = x_ref[...].astype(jnp.float32)        # [K, TB]
    w = w_ref[...].astype(jnp.float32)        # [K, C]

    # Degenerate contraction (K, C both tiny): VPU multiply + sublane reduce,
    # no MXU push/drain on the critical path.
    cols = []
    for c in range(C):
        wc = w[:, c:c + 1]                                        # [K, 1]
        cols.append(jnp.sum(wc * x, axis=0, keepdims=True))       # [1, TB]
    out = jnp.concatenate(cols, axis=0)                           # [C, TB] f32

    if type_ == 1:
        out = out + jnp.log(leftp_ref[...] + 0.001) + logprior_ref[...]
    elif type_ == 2:
        out = out + logprior_ref[...]
    elif type_ == 3:
        out = out + jnp.log(leftp_ref[...] + 0.001)

    # Softmax over the class axis (sublane axis, C rows; batch stays lane-dense).
    m = jnp.max(out, axis=0, keepdims=True)
    e = jnp.exp(out - m)
    s = jnp.sum(e, axis=0, keepdims=True)
    if approx_recip:
        o_ref[...] = e * pl.reciprocal(s, approx=True)
    else:
        o_ref[...] = e / s


def right_neural_net_em_forward(x, expert_weights, left_p, priority, type=0,
                                *, block_b=2048, compute_dtype=jnp.float32,
                                approx_recip=True):
    """x: [B, E, C]; expert_weights: [E, C, C] (nn.Linear weight layout [out, in]);
    left_p: [B, C]; priority: [C]. Returns softmax probabilities [B, C] (f32)."""
    B, E, C = x.shape
    K = E * C

    # Batch tile: multiple of 128 (lane-dense output), capped by the (padded) batch.
    tb = _round_up(min(block_b, _round_up(B, 128)), 128)
    b_pad = _round_up(B, tb)
    grid_b = b_pad // tb

    # Wrapper-side layout plumbing (lane-dense transposed slabs).
    x_t = jnp.transpose(x.astype(compute_dtype), (1, 2, 0)).reshape(K, B)   # [K, B]
    lp_t = jnp.transpose(left_p.astype(jnp.float32), (1, 0))                # [C, B]
    if b_pad != B:
        x_t = jnp.pad(x_t, ((0, 0), (0, b_pad - B)))
        lp_t = jnp.pad(lp_t, ((0, 0), (0, b_pad - B)))

    # Linear: y = v @ W^T  ->  w_stack[i*C + k_in, c_out] = W_i[c_out, k_in]
    w_stack = jnp.transpose(expert_weights, (0, 2, 1)).reshape(K, C).astype(compute_dtype)
    # Grid-invariant bias, hoisted out of the kernel.
    log_prior = jnp.log(priority.astype(jnp.float32)).reshape(C, 1)

    kernel = functools.partial(_em_kernel, type_=int(type),
                               approx_recip=bool(approx_recip))

    out_t = pl.pallas_call(
        kernel,
        out_shape=jax.ShapeDtypeStruct((C, b_pad), jnp.float32),
        grid=(grid_b,),
        in_specs=[
            pl.BlockSpec((K, tb), lambda i: (0, i)),   # x tile, pipelined over batch
            pl.BlockSpec((K, C), lambda i: (0, 0)),    # weights, VMEM-resident
            pl.BlockSpec((C, tb), lambda i: (0, i)),   # left_p tile
            pl.BlockSpec((C, 1), lambda i: (0, 0)),    # log(priority), resident
        ],
        out_specs=pl.BlockSpec((C, tb), lambda i: (0, i)),
        compiler_params=pltpu.CompilerParams(
            dimension_semantics=("parallel",)),        # batch axis -> both TCs on v7x
    )(x_t, w_stack, lp_t, log_prior)

    return jnp.transpose(out_t[:, :B], (1, 0))         # back to [B, C]


def _reference_forward(x, expert_weights, left_p, priority, type=0):
    # Pure-JAX reference mirroring the PyTorch module exactly (full f32 math).
    # out[b, c] = sum_{i, k} x[b, i, k] * W_i[c, k]
    out = jnp.sum(x[:, :, None, :] * expert_weights[None, :, :, :], axis=(1, 3))
    if type == 1:
        out = out + jnp.log(left_p + 0.001) + jnp.log(priority)
    elif type == 2:
        out = out + jnp.log(priority)
    elif type == 3:
        out = out + jnp.log(left_p + 0.001)
    return jax.nn.softmax(out, axis=1)


if __name__ == "__main__":
    key = jax.random.PRNGKey(0)

    # Small shapes consistent with the module (priority has length 2 -> num_classes=2).
    expert_num = 4
    num_classes = 2
    batch = 600   # deliberately not a multiple of 128 to exercise the padding path

    # Deterministic expert confusion matrices -> weights_init: W_i = log(T_i + 1e-4)
    eye = jnp.eye(num_classes, dtype=jnp.float32)
    tmats = jnp.stack([
        0.6 * eye + 0.4 / num_classes + 0.05 * i * (1.0 - eye)
        for i in range(expert_num)
    ])
    tmats = tmats / jnp.sum(tmats, axis=-1, keepdims=True)
    expert_weights = jnp.log(tmats + 1e-4)              # [E, C_out, C_in]

    priority = jnp.array([0.5, 0.5], dtype=jnp.float32)  # p_pure

    k1, k2 = jax.random.split(key)
    x = jax.random.normal(k1, (batch, expert_num, num_classes), dtype=jnp.float32)
    left_p = jax.nn.softmax(
        jax.random.normal(k2, (batch, num_classes), dtype=jnp.float32), axis=1)
    label = jnp.zeros((batch,), dtype=jnp.int32)          # unused by forward()

    ok = True

    # Strict correctness: f32 datapath, exact division in the softmax.
    for t in (0, 1, 2, 3):
        got = jax.block_until_ready(right_neural_net_em_forward(
            x, expert_weights, left_p, priority, type=t,
            block_b=256, compute_dtype=jnp.float32, approx_recip=False))
        want = _reference_forward(x, expert_weights, left_p, priority, type=t)
        if not jnp.allclose(got, want, atol=1e-5, rtol=1e-5):
            ok = False
            print(f"mismatch at type={t}: max abs err = "
                  f"{float(jnp.max(jnp.abs(got - want)))}")

    # Optimized datapath smoke test: bf16 operands + approximate (EUP) reciprocal.
    got = jax.block_until_ready(right_neural_net_em_forward(
        x, expert_weights, left_p, priority, type=1,
        block_b=256, compute_dtype=jnp.bfloat16, approx_recip=True))
    want = _reference_forward(x, expert_weights, left_p, priority, type=1)
    if not jnp.allclose(got, want, atol=5e-2, rtol=5e-2):
        ok = False
        print("mismatch in bf16 / approx-reciprocal path: max abs err = "
              f"{float(jnp.max(jnp.abs(got - want)))}")

    if ok:
        print("KERNEL_OK")
</pallas_src>

<mosaic_0001>
module attributes {stable_mosaic.version = 11 : i64} {
  func.func @_em_kernel(%arg0: i32, %arg1: memref<8x256xf32, #tpu.memory_space<vmem>>, %arg2: memref<8x2xf32, #tpu.memory_space<vmem>>, %arg3: memref<2x256xf32, #tpu.memory_space<vmem>>, %arg4: memref<2x1xf32, #tpu.memory_space<vmem>>, %arg5: memref<2x256xf32, #tpu.memory_space<vmem>>) attributes {dimension_semantics = [#tpu.dimension_semantics<parallel>], iteration_bounds = array<i64: 3>, scalar_prefetch = 0 : i64, scratch_operands = 0 : i64, tpu.core_type = #tpu.core_type<tc>, window_params = [{transform_indices = @transform_0, window_bounds = array<i64: 8, 256>}, {pipeline_mode = #tpu.pipeline_mode<synchronous>, transform_indices = @transform_1, window_bounds = array<i64: 8, 2>}, {transform_indices = @transform_2, window_bounds = array<i64: 2, 256>}, {pipeline_mode = #tpu.pipeline_mode<synchronous>, transform_indices = @transform_3, window_bounds = array<i64: 2, 1>}, {transform_indices = @transform_4, window_bounds = array<i64: 2, 256>}]} {
    %c0 = arith.constant 0 : index
    %c0_0 = arith.constant 0 : index
    %0 = vector.load %arg1[%c0, %c0_0] : memref<8x256xf32, #tpu.memory_space<vmem>>, vector<8x256xf32>
    %c0_1 = arith.constant 0 : index
    %c0_2 = arith.constant 0 : index
    %1 = vector.load %arg2[%c0_1, %c0_2] : memref<8x2xf32, #tpu.memory_space<vmem>>, vector<8x2xf32>
    %2 = vector.extract_strided_slice %1 {offsets = [0, 0], sizes = [8, 1], strides = [1, 1]} : vector<8x2xf32> to vector<8x1xf32>
    %3 = vector.broadcast %2 : vector<8x1xf32> to vector<8x256xf32>
    %4 = arith.mulf %3, %0 : vector<8x256xf32>
    %cst = arith.constant dense<0.000000e+00> : vector<256xf32>
    %5 = vector.multi_reduction <add>, %4, %cst [0] : vector<8x256xf32> to vector<256xf32>
    %6 = vector.shape_cast %5 : vector<256xf32> to vector<1x256xf32>
    %7 = vector.extract_strided_slice %1 {offsets = [0, 1], sizes = [8, 1], strides = [1, 1]} : vector<8x2xf32> to vector<8x1xf32>
    %8 = vector.broadcast %7 : vector<8x1xf32> to vector<8x256xf32>
    %9 = arith.mulf %8, %0 : vector<8x256xf32>
    %cst_3 = arith.constant dense<0.000000e+00> : vector<256xf32>
    %10 = vector.multi_reduction <add>, %9, %cst_3 [0] : vector<8x256xf32> to vector<256xf32>
    %11 = vector.shape_cast %10 : vector<256xf32> to vector<1x256xf32>
    %12 = tpu.concatenate %6, %11 in 0 : vector<1x256xf32>, vector<1x256xf32> -> vector<2x256xf32>
    %cst_4 = arith.constant dense<0xFF800000> : vector<256xf32>
    %13 = vector.multi_reduction <maximumf>, %12, %cst_4 [0] : vector<2x256xf32> to vector<256xf32>
    %14 = vector.shape_cast %13 : vector<256xf32> to vector<1x256xf32>
    %15 = vector.broadcast %14 : vector<1x256xf32> to vector<2x256xf32>
    %16 = arith.subf %12, %15 : vector<2x256xf32>
    %17 = math.exp %16 : vector<2x256xf32>
    %cst_5 = arith.constant dense<0.000000e+00> : vector<256xf32>
    %18 = vector.multi_reduction <add>, %17, %cst_5 [0] : vector<2x256xf32> to vector<256xf32>
    %19 = vector.shape_cast %18 : vector<256xf32> to vector<1x256xf32>
    %20 = vector.broadcast %19 : vector<1x256xf32> to vector<2x256xf32>
    %21 = arith.divf %17, %20 : vector<2x256xf32>
    %c0_6 = arith.constant 0 : index
    %c0_7 = arith.constant 0 : index
    %22 = vector.load %arg5[%c0_6, %c0_7] : memref<2x256xf32, #tpu.memory_space<vmem>>, vector<2x256xf32>
    tpu.vector_store %arg5[%c0_6, %c0_7], %21 {strides = array<i32>} : memref<2x256xf32, #tpu.memory_space<vmem>>, vector<2x256xf32>,
    return
  }
  func.func @transform_0(%arg0: i32) -> (i32, i32) {
    %c0_i32 = arith.constant 0 : i32
    %c0_i32_0 = arith.constant 0 : i32
    return %c0_i32, %arg0 : i32, i32
  }
  func.func @transform_1(%arg0: i32) -> (i32, i32) {
    %c0_i32 = arith.constant 0 : i32
    %c0_i32_0 = arith.constant 0 : i32
    %c0_i32_1 = arith.constant 0 : i32
    return %c0_i32, %c0_i32_0 : i32, i32
  }
  func.func @transform_2(%arg0: i32) -> (i32, i32) {
    %c0_i32 = arith.constant 0 : i32
    %c0_i32_0 = arith.constant 0 : i32
    return %c0_i32, %arg0 : i32, i32
  }
  func.func @transform_3(%arg0: i32) -> (i32, i32) {
    %c0_i32 = arith.constant 0 : i32
    %c0_i32_0 = arith.constant 0 : i32
    %c0_i32_1 = arith.constant 0 : i32
    return %c0_i32, %c0_i32_0 : i32, i32
  }
  func.func @transform_4(%arg0: i32) -> (i32, i32) {
    %c0_i32 = arith.constant 0 : i32
    %c0_i32_0 = arith.constant 0 : i32
    return %c0_i32, %arg0 : i32, i32
  }
}

</mosaic_0001>

<llo_original>
// kernel: tpu_custom_call.1
$region0: #{tpu_custom_call.1}
  #allocation0 [shape = 'u32[]', space=smem, size = 0x4, offset = 0x4, fixed_abs, tag = 'smem constant byte address 0x4 - core index']
  #allocation1 [shape = 'u32[144,128]{1,0:T(1,128)}', space=vmem, size = 0x12000, scoped, tag = 'internal scratch']
  %s0 = inlined_call_operand.hbm [shape: f32[8,768], index: 0, kind: input, shape index: {}]
  %s1 = inlined_call_operand.vmem [shape: f32[8,2], index: 1, kind: input, shape index: {}]
  %s2 = inlined_call_operand.vmem [shape: f32[2,768], index: 2, kind: input, shape index: {}]
  %s3 = inlined_call_operand.vmem [shape: f32[2,1], index: 3, kind: input, shape index: {}]
  %s4 = inlined_call_operand.hbm [shape: f32[2,768], index: 4, kind: output, shape index: {}]
  %s5 = sld [smem:[#allocation0]]
  $region53: #{tpu_custom_call.1} parent=0
    _
  %s7 = ssub.s32 1, %s5
  %s8 = scalar_select 0, %s7, %s5
  $region1: #{tpu_custom_call.1} parent=0
    #allocation2 [shape = 'u8[16384]{0}', space=vmem, size = 0x4000, scoped, tag = 'input window, operand 0']
    #allocation3 [shape = 's32[2]{0}', space=sflag, size = 0x8, scoped, tag = 'scoped memory for tpu_custom_call.1']
    #allocation4 [shape = 's32[2]{0}', space=sflag, size = 0x8, scoped, tag = 'scoped memory for tpu_custom_call.1']
    #allocation5 [shape = 'u8[4096]{0}', space=vmem, size = 0x1000, scoped, tag = 'output window, operand 0']
    %9 = vsyncpa [#allocation3], 0
    %s10 = scalar_lea.sflag [#allocation3], 1
    %11 = vsyncpa %s10, 0
    %12 = vsyncpa [#allocation4], 0
    %s13 = scalar_lea.sflag [#allocation4], 1
    %14 = vsyncpa %s13, 0
    loop: start=0, step=1, limit=5
    $region2: #{tpu_custom_call.1} parent=1 // loop_pre_header
      _
    $region3: #{tpu_custom_call.1} parent=1 // loop_header
      %s16 = sphi 0, %s20
      %p17 = scmp.ge.s32.totalorder %s16, 5
      %s26 = sphi 0, %s28
      %s29 = sphi 0, %s26
      %s30 = sphi 0, %s29
      %s46 = sphi 0, %s30
      %s50 = sphi 0, %s50
      %s52 = sphi 0, %s50
      %s53 = sphi 0, %s52
      %s67 = sphi 0, %s53
      %s73 = sphi 0, %s75
      %s76 = sphi 0, %s73
      %s77 = sphi 0, %s76
      %s93 = sphi 0, %s77
      %s97 = sphi 0, %s97
      %s99 = sphi 0, %s97
      %s100 = sphi 0, %s99
      %s114 = sphi 0, %s100
      %s120 = sphi 0, %s122
      %s123 = sphi 0, %s120
      %s124 = sphi 0, %s123
      %s140 = sphi 0, %s124
    $region4: #{tpu_custom_call.1} parent=1 // loop_header_branch
      %19 = sbr.rel (%p17) target = $region8
    $region5: #{tpu_custom_call.1} parent=1 // loop_body
      %s21 = ssub.s32 %s16, 1
      %s22 = ssub.s32 %s16, 2
      %s23 = sadd.s32 %s16, 1
      %s24 = ssub.s32 %s16, %s23
      %p25 = scmp.eq.s32.totalorder %s24, 0
      %s27 = sadd.s32 %s26, 1
      %s28 = scalar_select %p25, %s26, %s27
      %p31 = pneg %p25
      %p32 = scmp.eq.s32.totalorder %s16, 2
      %p33 = por %p31, %p32
      %p34 = scmp.ne.s32.totalorder %s26, %s29
      %p35 = scmp.eq.s32.totalorder %s16, 0
      %p36 = por %p34, %p35
      %p37 = scmp.ne.s32.totalorder %s26, %s29
      %p38 = scmp.eq.s32.totalorder %s21, 2
      %p39 = por %p37, %p38
      %p40 = scmp.ne.s32.totalorder %s29, %s30
      %p41 = scmp.eq.s32.totalorder %s21, 0
      %p42 = por %p40, %p41
      %p43 = scmp.ne.s32.totalorder %s29, %s30
      %p44 = scmp.eq.s32.totalorder %s22, 2
      %p45 = por %p43, %p44
      %p47 = scmp.ne.s32.totalorder %s30, %s46
      %p48 = scmp.eq.s32.totalorder %s22, 0
      %p49 = por %p47, %p48
      %s51 = sadd.s32 %s50, 1
      %p54 = scmp.eq.s32.totalorder %s16, 2
      %p55 = scmp.ne.s32.totalorder %s50, %s52
      %p56 = scmp.eq.s32.totalorder %s16, 0
      %p57 = por %p55, %p56
      %p58 = scmp.ne.s32.totalorder %s50, %s52
      %p59 = scmp.eq.s32.totalorder %s21, 2
      %p60 = por %p58, %p59
      %p61 = scmp.ne.s32.totalorder %s52, %s53
      %p62 = scmp.eq.s32.totalorder %s21, 0
      %p63 = por %p61, %p62
      %p64 = scmp.ne.s32.totalorder %s52, %s53
      %p65 = scmp.eq.s32.totalorder %s22, 2
      %p66 = por %p64, %p65
      %p68 = scmp.ne.s32.totalorder %s53, %s67
      %p69 = scmp.eq.s32.totalorder %s22, 0
      %p70 = por %p68, %p69
      %s71 = ssub.s32 %s16, %s23
      %p72 = scmp.eq.s32.totalorder %s71, 0
      %s74 = sadd.s32 %s73, 1
      %s75 = scalar_select %p72, %s73, %s74
      %p78 = pneg %p72
      %p79 = scmp.eq.s32.totalorder %s16, 2
      %p80 = por %p78, %p79
      %p81 = scmp.ne.s32.totalorder %s73, %s76
      %p82 = scmp.eq.s32.totalorder %s16, 0
      %p83 = por %p81, %p82
      %p84 = scmp.ne.s32.totalorder %s73, %s76
      %p85 = scmp.eq.s32.totalorder %s21, 2
      %p86 = por %p84, %p85
      %p87 = scmp.ne.s32.totalorder %s76, %s77
      %p88 = scmp.eq.s32.totalorder %s21, 0
      %p89 = por %p87, %p88
      %p90 = scmp.ne.s32.totalorder %s76, %s77
      %p91 = scmp.eq.s32.totalorder %s22, 2
      %p92 = por %p90, %p91
      %p94 = scmp.ne.s32.totalorder %s77, %s93
      %p95 = scmp.eq.s32.totalorder %s22, 0
      %p96 = por %p94, %p95
      %s98 = sadd.s32 %s97, 1
      %p101 = scmp.eq.s32.totalorder %s16, 2
      %p102 = scmp.ne.s32.totalorder %s97, %s99
      %p103 = scmp.eq.s32.totalorder %s16, 0
      %p104 = por %p102, %p103
      %p105 = scmp.ne.s32.totalorder %s97, %s99
      %p106 = scmp.eq.s32.totalorder %s21, 2
      %p107 = por %p105, %p106
      %p108 = scmp.ne.s32.totalorder %s99, %s100
      %p109 = scmp.eq.s32.totalorder %s21, 0
      %p110 = por %p108, %p109
      %p111 = scmp.ne.s32.totalorder %s99, %s100
      %p112 = scmp.eq.s32.totalorder %s22, 2
      %p113 = por %p111, %p112
      %p115 = scmp.ne.s32.totalorder %s100, %s114
      %p116 = scmp.eq.s32.totalorder %s22, 0
      %p117 = por %p115, %p116
      %s118 = ssub.s32 %s16, %s23
      %p119 = scmp.eq.s32.totalorder %s118, 0
      %s121 = sadd.s32 %s120, 1
      %s122 = scalar_select %p119, %s120, %s121
      %p125 = pneg %p119
      %p126 = scmp.eq.s32.totalorder %s16, 2
      %p127 = por %p125, %p126
      %p128 = scmp.ne.s32.totalorder %s120, %s123
      %p129 = scmp.eq.s32.totalorder %s16, 0
      %p130 = por %p128, %p129
      %p131 = scmp.ne.s32.totalorder %s120, %s123
      %p132 = scmp.eq.s32.totalorder %s21, 2
      %p133 = por %p131, %p132
      %p134 = scmp.ne.s32.totalorder %s123, %s124
      %p135 = scmp.eq.s32.totalorder %s21, 0
      %p136 = por %p134, %p135
      %p137 = scmp.ne.s32.totalorder %s123, %s124
      %p138 = scmp.eq.s32.totalorder %s22, 2
      %p139 = por %p137, %p138
      %p141 = scmp.ne.s32.totalorder %s124, %s140
      %p142 = scmp.eq.s32.totalorder %s22, 0
      %p143 = por %p141, %p142
      %p144 = scmp.le.s32.totalorder 1, %s16
      %p145 = scmp.lt.s32.totalorder %s16, 4
      %p146 = pnand %p144, %p145
      %p147 = pneg %p146
      // Predicated region
      $region9: #{tpu_custom_call.1} parent=5 // pred_check
        _
      $region10: #{tpu_custom_call.1} parent=5 // pred_check_branch
        %149 = sbr.rel (%p146) target = $region12
      $region11: #{tpu_custom_call.1} parent=5 // pred_region
        %s150 = ssub.s32 %s16, 1
        // Predicated region
        $region13: #{tpu_custom_call.1} parent=11 // pred_check
          %p151 = pneg %p63
        $region14: #{tpu_custom_call.1} parent=11 // pred_check_branch
          %153 = sbr.rel (%p151) target = $region16
        $region15: #{tpu_custom_call.1} parent=11 // pred_region
          _
        $region16: #{tpu_custom_call.1} parent=11 // pred_fallthru
          _
        // Predicated region
        $region17: #{tpu_custom_call.1} parent=11 // pred_check
          %p154 = pneg %p110
        $region18: #{tpu_custom_call.1} parent=11 // pred_check_branch
          %156 = sbr.rel (%p154) target = $region20
        $region19: #{tpu_custom_call.1} parent=11 // pred_region
          _
        $region20: #{tpu_custom_call.1} parent=11 // pred_fallthru
          _
      $region12: #{tpu_custom_call.1} parent=5 // pred_fallthru
        _
      %p157 = scmp.lt.s32.totalorder %s16, 3
      // Predicated region
      $region21: #{tpu_custom_call.1} parent=5 // pred_check
        %p158 = pneg %p157
      $region22: #{tpu_custom_call.1} parent=5 // pred_check_branch
        %160 = sbr.rel (%p158) target = $region24
      $region23: #{tpu_custom_call.1} parent=5 // pred_region
        // Predicated region
        $region25: #{tpu_custom_call.1} parent=23 // pred_check
          %p161 = pneg %p36
        $region26: #{tpu_custom_call.1} parent=23 // pred_check_branch
          %163 = sbr.rel (%p161) target = $region28
        $region27: #{tpu_custom_call.1} parent=23 // pred_region
          %s164 = sand.u32 %s26, 1
          %s165 = scalar_lea.sflag [#allocation3], %s164
          %s166 = sand.u32 %s26, 1
          %s167 = smul.addr %s166, 16
          %s168 = scalar_lea.vmem [#allocation2], %s167
          %s169 = smul.u32 2, %s16
          %s171 = ssub.s32 256, 256
          %172 = vsyncadd %s165, %s171
          %s173 = smul.addr %s169, 128
          %s174 = scalar_lea.hbm %s0, %s173
          %s176 = sshll.u32 %s168, 4
          %s177 = int_to_ptr.vmem [resolvable:$true] %s176
          %179 = dma.hbm_to_vmem [thread:$0]  %s174, 256, %s177, %s165
        $region28: #{tpu_custom_call.1} parent=23 // pred_fallthru
          _
        // Predicated region
        $region29: #{tpu_custom_call.1} parent=23 // pred_check
          %p180 = pneg %p83
        $region30: #{tpu_custom_call.1} parent=23 // pred_check_branch
          %182 = sbr.rel (%p180) target = $region32
        $region31: #{tpu_custom_call.1} parent=23 // pred_region
          %s183 = smul.u32 2, %s16
          %p184 = scmp.lt.s32.totalorder %s183, 5
          %s185 = scalar_select %p184, %s183, 5
          %s186 = smul.addr %s185, 2
          %s187 = scalar_lea.vmem %s2, %s186
          %s188 = smul.u32 2, %s16
        $region32: #{tpu_custom_call.1} parent=23 // pred_fallthru
          _
      $region24: #{tpu_custom_call.1} parent=5 // pred_fallthru
        _
      %p189 = scmp.le.s32.totalorder 1, %s16
      %p190 = scmp.lt.s32.totalorder %s16, 4
      %p191 = pnand %p189, %p190
      %p192 = pneg %p191
      // Predicated region
      $region33: #{tpu_custom_call.1} parent=5 // pred_check
        _
      $region34: #{tpu_custom_call.1} parent=5 // pred_check_branch
        %194 = sbr.rel (%p191) target = $region36
      $region35: #{tpu_custom_call.1} parent=5 // pred_region
        %s195 = ssub.s32 %s16, 1
        %s196 = sand.u32 %s29, 1
        %s197 = scalar_lea.sflag [#allocation3], %s196
        %s198 = sand.u32 %s29, 1
        %s199 = smul.addr %s198, 16
        %s200 = scalar_lea.vmem [#allocation2], %s199
        // Predicated region
        $region37: #{tpu_custom_call.1} parent=35 // pred_check
          %p201 = pneg %p42
        $region38: #{tpu_custom_call.1} parent=35 // pred_check_branch
          %203 = sbr.rel (%p201) target = $region40
        $region39: #{tpu_custom_call.1} parent=35 // pred_region
          %204 = dma.done %s197, 256
        $region40: #{tpu_custom_call.1} parent=35 // pred_fallthru
          _
        %s205 = sand.u32 %s29, 1
        %s206 = scalar_lea.sflag [#allocation3], %s205
        %s207 = sand.u32 %s29, 1
        %s208 = smul.addr %s207, 16
        %s209 = scalar_lea.vmem [#allocation2], %s208
        %p210 = pneg %p42
        %p211 = pneg %p39
        %p212 = pneg %p63
        %p213 = pneg %p60
        %s214 = smul.u32 2, %s21
        %p215 = scmp.lt.s32.totalorder %s214, 5
        %s216 = scalar_select %p215, %s214, 5
        %s217 = smul.addr %s216, 2
        %s218 = scalar_lea.vmem %s2, %s217
        %p219 = pneg %p89
        %p220 = pneg %p86
        %p221 = pneg %p110
        %p222 = pneg %p107
        %p223 = pneg %p136
        %p224 = pneg %p133
        %s225 = sand.u32 %s123, 1
        %s226 = scalar_lea.sflag [#allocation4], %s225
        %s227 = sand.u32 %s123, 1
        %s228 = smul.addr %s227, 4
        %s229 = scalar_lea.vmem [#allocation5], %s228
        %s230 = smul.u32 2, %s21
        %s231 = smul.u32 2, %s21
        %p232 = scmp.lt.s32.totalorder %s231, 5
        %s233 = scalar_select %p232, %s231, 5
        %s234 = smul.addr %s233, 2
        %s235 = scalar_lea.vmem %s2, %s234
        %s236 = smul.u32 2, %s21
        %s237 = smul.u32 2, %s21
        %v238 = vld [vmem:[%s200] sm:$0xff]
        %v239 = vld [vmem:[%s200 + $0x8] sm:$0xff]
        %v240 = vld [vmem:[%s1] sm:$0xff]
        %242 = vset.pattern.permute.xlu0 0
        %243 = vperm.xlu0 %242, %v240
        %v244 = vpop.permute.xlu0 %243
        %v246 = vmul.f32 %v244, %v238
        %v247 = vmul.f32 %v244, %v239
        %v248 = vrot.slane %v246, 4
        %v249 = vadd.f32 %v246, %v248
        %v250 = vrot.slane %v249, 2
        %v251 = vadd.f32 %v249, %v250
        %v252 = vrot.slane %v251, 1
        %v253 = vadd.f32 %v251, %v252
        %v254 = vrot.slane %v247, 4
        %v255 = vadd.f32 %v247, %v254
        %v256 = vrot.slane %v255, 2
        %v257 = vadd.f32 %v255, %v256
        %v258 = vrot.slane %v257, 1
        %v259 = vadd.f32 %v257, %v258
        %260 = vset.pattern.permute.xlu0 1
        %261 = vperm.xlu0 %260, %v240
        %v262 = vpop.permute.xlu0 %261
        %v264 = vmul.f32 %v262, %v238
        %v265 = vmul.f32 %v262, %v239
        %v266 = vrot.slane %v264, 4
        %v267 = vadd.f32 %v264, %v266
        %v268 = vrot.slane %v267, 2
        %v269 = vadd.f32 %v267, %v268
        %v270 = vrot.slane %v269, 1
        %v271 = vadd.f32 %v269, %v270
        %v272 = vrot.slane %v265, 4
        %v273 = vadd.f32 %v265, %v272
        %v274 = vrot.slane %v273, 2
        %v275 = vadd.f32 %v273, %v274
        %v276 = vrot.slane %v275, 1
        %v277 = vadd.f32 %v275, %v276
        %vm278 = vcmask 1040384
        %v279 = vsel %vm278, %v253, %v271
        %v280 = vsel %vm278, %v259, %v277
        %vm281 = vcmask 1041408
        %v282 = vsel %vm281, %v279, -inf
        %v283 = vrot.slane %v282, 4
        %v284 = vmax.f32 %v282, %v283
        %v285 = vrot.slane %v284, 2
        %v286 = vmax.f32 %v284, %v285
        %v287 = vrot.slane %v286, 1
        %v288 = vmax.f32 %v286, %v287
        %v289 = vsel %vm281, %v280, -inf
        %v290 = vrot.slane %v289, 4
        %v291 = vmax.f32 %v289, %v290
        %v292 = vrot.slane %v291, 2
        %v293 = vmax.f32 %v291, %v292
        %v294 = vrot.slane %v293, 1
        %v295 = vmax.f32 %v293, %v294
        %v296 = vsub.f32 %v279, %v288
        %v297 = vsub.f32 %v280, %v295
        %v298 = vmul.f32 %v296, 1.442695
        %v299 = vpow.pop %v298
        %v300 = vmul.f32 %v297, 1.442695
        %v301 = vpow.pop %v300
        %v302 = vsel %vm281, %v299, 0.0
        %v303 = vrot.slane %v302, 4
        %v304 = vadd.f32 %v302, %v303
        %v305 = vrot.slane %v304, 2
        %v306 = vadd.f32 %v304, %v305
        %v307 = vrot.slane %v306, 1
        %v308 = vadd.f32 %v306, %v307
        %v309 = vsel %vm281, %v301, 0.0
        %v310 = vrot.slane %v309, 4
        %v311 = vadd.f32 %v309, %v310
        %v312 = vrot.slane %v311, 2
        %v313 = vadd.f32 %v311, %v312
        %v314 = vrot.slane %v313, 1
        %v315 = vadd.f32 %v313, %v314
        %v316 = vrcp.pop %v308
        %v317 = vmul.f32 %v299, %v316
        %v318 = vrcp.pop %v315
        %v319 = vmul.f32 %v301, %v318
        %v322 = vcombine.low %v317, %v319
        %v324 = vunpack.c.l.s4 1983009808
        %v325 = vunpack.c.0.s8 %v324
        %v326 = vlaneseq
        %v327 = vshrl.u32 %v326, 7
        %v328 = vsub.s32 %v325, %v327
        %v329 = vrot.slane %v322, %v328
        %331 = vst [vmem:[%s229] sm:$0xf] %v329
        %s332 = sand.u32 %s123, 1
        %s333 = scalar_lea.sflag [#allocation4], %s332
        %s334 = sand.u32 %s123, 1
        %s335 = smul.addr %s334, 4
        %s336 = scalar_lea.vmem [#allocation5], %s335
        // Predicated region
        $region41: #{tpu_custom_call.1} parent=35 // pred_check
          %p337 = pneg %p133
        $region42: #{tpu_custom_call.1} parent=35 // pred_check_branch
          %339 = sbr.rel (%p337) target = $region44
        $region43: #{tpu_custom_call.1} parent=35 // pred_region
          %s340 = smul.u32 2, %s21
          %s342 = ssub.s32 64, 64
          %343 = vsyncadd %s333, %s342
          %s344 = smul.addr %s340, 32
          %s345 = scalar_lea.hbm %s4, %s344
          %s347 = sshll.u32 %s336, 4
          %s348 = int_to_ptr.vmem [resolvable:$true] %s347
          %350 = dma.vmem_to_hbm [thread:$0]  %s348, 64, %s345, %s333
        $region44: #{tpu_custom_call.1} parent=35 // pred_fallthru
          _
      $region36: #{tpu_custom_call.1} parent=5 // pred_fallthru
        _
      %p351 = scmp.le.s32.totalorder 2, %s16
      // Predicated region
      $region45: #{tpu_custom_call.1} parent=5 // pred_check
        %p352 = pneg %p351
      $region46: #{tpu_custom_call.1} parent=5 // pred_check_branch
        %354 = sbr.rel (%p352) target = $region48
      $region47: #{tpu_custom_call.1} parent=5 // pred_region
        %s355 = ssub.s32 %s16, 2
        // Predicated region
        $region49: #{tpu_custom_call.1} parent=47 // pred_check
          %p356 = pneg %p139
        $region50: #{tpu_custom_call.1} parent=47 // pred_check_branch
          %358 = sbr.rel (%p356) target = $region52
        $region51: #{tpu_custom_call.1} parent=47 // pred_region
          %s359 = sand.u32 %s124, 1
          %s360 = scalar_lea.sflag [#allocation4], %s359
          %s361 = sand.u32 %s124, 1
          %s362 = smul.addr %s361, 4
          %s363 = scalar_lea.vmem [#allocation5], %s362
          %364 = dma.done %s360, 64
        $region52: #{tpu_custom_call.1} parent=47 // pred_fallthru
          _
      $region48: #{tpu_custom_call.1} parent=5 // pred_fallthru
        _
    $region6: #{tpu_custom_call.1} parent=1 // loop_footer
      %s20 = sadd.s32 1, %s16
    $region7: #{tpu_custom_call.1} parent=1 // loop_footer_branch
      %15 = sbr.rel target = $region3
    $region8: #{tpu_custom_call.1} parent=1 // loop_exit
      _
    %365 = vsyncpa [#allocation3], 1
    %s366 = scalar_lea.sflag [#allocation3], 1
    %367 = vsyncpa %s366, 1
    %368 = vsyncpa [#allocation4], 1
    %s369 = scalar_lea.sflag [#allocation4], 1
    %370 = vsyncpa %s369, 1

</llo_original>
